<compile_context>
chip_gen: v6e
topology: v6e:2x2x1
jax: 0.10.0
libtpu: 0.0.40
codegen_flags: <defaults>
</compile_context>

<pallas_src>
import jax
import jax.numpy as jnp
from jax.experimental import pallas as pl
from jax.experimental.pallas import tpu as pltpu


_LANE = 128
_DEFAULT_VMEM = 64 * 1024 * 1024  # v7x per-TC VMEM = smallest across v5e/v6e/v7x


def _round_up(x, m):
    return ((x + m - 1) // m) * m


def _vmem_capacity_bytes():
    """Per-generation VMEM capacity (64 MiB on v7x, 128 MiB on v5e/v6e)."""
    try:
        info = pltpu.get_tpu_info()
        cap = int(getattr(info, "vmem_capacity_bytes", _DEFAULT_VMEM))
        return cap if cap > 0 else _DEFAULT_VMEM
    except Exception:
        return _DEFAULT_VMEM


def _latent_goal_cost_kernel(w_ref, state_ref, goal_ref, out_ref):
    """One (TILE_N, D) state slab -> one lane-dense (1, TILE_N) row of costs.

    w_ref:     (1, 1)          SMEM  (weight scalar)
    state_ref: (TILE_N, D)     VMEM
    goal_ref:  (1, D)          VMEM  (broadcast over rows)
    out_ref:   (1, 1, TILE_N)  VMEM
    """
    d = state_ref.shape[-1]
    # f32 math regardless of input dtype (bf16-safe around the cost<1 threshold).
    diff = state_ref[...].astype(jnp.float32) - goal_ref[...].astype(jnp.float32)
    sq = diff * diff                                          # VPU
    # Reduce over D on the (otherwise idle) MXU instead of an XLU lane-reduce:
    # for D <= 128 the rotate+add log-tree saturates the 2 XLU ports long before
    # HBM does (worst on v7x); streaming sq as MXU activations against a ones
    # column is effectively free and keeps the kernel memory-bound.
    ones_col = jnp.ones((d, 1), dtype=jnp.float32)
    sq_sum = jnp.dot(sq, ones_col, preferred_element_type=jnp.float32)[:, 0]  # (TILE_N,)
    # One relayout to the lane-dense output row, then cheap scalar ops on the
    # dense (1, TILE_N) layout.
    cost = w_ref[0, 0] * sq_sum[None, :]
    cost = jnp.where(cost < 1.0, jnp.zeros_like(cost), cost)
    out_ref[0] = cost.astype(out_ref.dtype)


def _choose_tile_n(n, d, itemsize, vmem_cap):
    """Rows per grid step, sized by lane/sublane-padded bytes.

    Targets ~4 MiB of state per pipeline buffer (past the ~1-2 MiB knee where
    BlockSpec pipelining reaches 85%+ of HBM roofline), bounded by a
    per-generation VMEM budget (2x state + 2x out double buffering), and capped
    at ~half the problem so v7x's two TensorCores both get work.
    """
    d_pad = _round_up(d, _LANE)
    state_row_bytes = d_pad * itemsize        # lane-padded VMEM bytes per state row
    out_row_bytes = 32                        # (1, T) block is sublane-padded: 32 B / element

    # Total pipelined footprint budget: ~32 MiB on v7x (64 MiB VMEM),
    # ~72 MiB on v5e/v6e (128 MiB VMEM).
    total_budget = max((vmem_cap * 5) // 8 - (8 << 20), 8 << 20)
    budget_rows = max(total_budget // (2 * (state_row_bytes + out_row_bytes)), 1)
    target_rows = max((4 << 20) // state_row_bytes, 1)        # ~4 MiB state / buffer

    n_cap = _round_up(max(n, 1), _LANE)                       # no point tiling past the problem
    two_step = max(_LANE, _round_up((n + 1) // 2, _LANE))     # >=2 grid steps when possible (v7x)

    tile = min(budget_rows, target_rows, n_cap, two_step)
    if tile >= _LANE:
        tile = (tile // _LANE) * _LANE                        # lane-aligned output row
    else:
        tile = max(8, (tile // 8) * 8)                        # huge-D fallback: respect VMEM budget
    if n < tile:
        tile = n                                              # single full-array block (always legal)
    return max(tile, 1)


def latent_goal_cost(latent_state_batch, latent_goal, weight):
    """Pallas implementation of LatentGoalCost.forward.

    latent_state_batch: (B, H, D)
    latent_goal:        (D,)
    weight:             python float or traced scalar
    returns:            (B, H) costs
    """
    B, H, D = latent_state_batch.shape
    N = B * H
    dtype = latent_state_batch.dtype
    itemsize = jnp.dtype(dtype).itemsize

    vmem_cap = _vmem_capacity_bytes()
    tile_n = _choose_tile_n(N, D, itemsize, vmem_cap)
    grid_n = pl.cdiv(N, tile_n)

    # No wrapper-side padding: the ragged last block's out-of-bounds rows yield
    # garbage costs that are sliced off below (never read otherwise).
    state_flat = latent_state_batch.reshape(N, D)
    goal_2d = latent_goal.reshape(1, D)
    w_smem = jnp.asarray(weight, dtype=jnp.float32).reshape(1, 1)

    d_pad = _round_up(D, _LANE)
    est_vmem = 2 * tile_n * d_pad * itemsize + 2 * tile_n * 32 + 16 * d_pad * itemsize
    vmem_limit = int(min(vmem_cap - (8 << 20), max(est_vmem + (16 << 20), 32 << 20)))

    cost_est = pl.CostEstimate(
        flops=3 * grid_n * tile_n * D,                         # sub, square, MXU reduce
        transcendentals=0,
        bytes_accessed=N * D * itemsize + D * itemsize + grid_n * tile_n * itemsize,
    )

    out = pl.pallas_call(
        _latent_goal_cost_kernel,
        out_shape=jax.ShapeDtypeStruct((grid_n, 1, tile_n), dtype),
        grid=(grid_n,),
        in_specs=[
            pl.BlockSpec(memory_space=pltpu.MemorySpace.SMEM),   # weight scalar
            pl.BlockSpec((tile_n, D), lambda i: (i, 0)),         # state tile (pipelined)
            pl.BlockSpec((1, D), lambda i: (0, 0)),              # goal (resident, reused)
        ],
        out_specs=pl.BlockSpec((1, 1, tile_n), lambda i: (i, 0, 0)),  # lane-dense row
        compiler_params=pltpu.CompilerParams(
            dimension_semantics=("parallel",),                   # megacore sharding on v7x
            vmem_limit_bytes=vmem_limit,
        ),
        cost_estimate=cost_est,
    )(w_smem, state_flat, goal_2d)

    # TODO(synk): the PyTorch module's debug `print('latent cost: ', cost[:10])`
    # is a host-side side effect and is intentionally omitted from the kernel.
    return out.reshape(grid_n * tile_n)[:N].reshape(B, H)


if __name__ == "__main__":
    key = jax.random.PRNGKey(0)
    k1, k2 = jax.random.split(key)

    batch, horizon, latent_dim = 2, 8, 32
    weight = 10.0  # module takes weight in __init__

    latent_state_batch = jax.random.normal(
        k1, (batch, horizon, latent_dim), dtype=jnp.float32
    )
    latent_goal = jax.random.normal(k2, (latent_dim,), dtype=jnp.float32)

    cost = latent_goal_cost(latent_state_batch, latent_goal, weight)
    cost = jax.block_until_ready(cost)

    # Reference check (plain JAX) to validate semantics.
    ref = weight * jnp.sum((latent_state_batch - latent_goal) ** 2, axis=-1)
    ref = jnp.where(ref < 1.0, jnp.zeros_like(ref), ref)
    assert cost.shape == (batch, horizon)
    assert jnp.allclose(cost, ref, rtol=1e-5, atol=1e-5)

    print("KERNEL_OK")
</pallas_src>

<mosaic_0001>
module attributes {stable_mosaic.version = 11 : i64} {
  func.func @_latent_goal_cost_kernel(%arg0: i32, %arg1: memref<1x1xf32, #tpu.memory_space<smem>>, %arg2: memref<16x32xf32, #tpu.memory_space<vmem>>, %arg3: memref<1x32xf32, #tpu.memory_space<vmem>>, %arg4: memref<1x1x16xf32, #tpu.memory_space<vmem>>) attributes {dimension_semantics = [#tpu.dimension_semantics<parallel>], iteration_bounds = array<i64: 1>, scalar_prefetch = 0 : i64, scratch_operands = 0 : i64, tpu.core_type = #tpu.core_type<tc>, window_params = [{transform_indices = @transform_0, window_bounds = array<i64: 1, 1>}, {transform_indices = @transform_1, window_bounds = array<i64: 16, 32>}, {pipeline_mode = #tpu.pipeline_mode<synchronous>, transform_indices = @transform_2, window_bounds = array<i64: 1, 32>}, {transform_indices = @transform_3, window_bounds = array<i64: 1, 1, 16>}]} {
    %c0 = arith.constant 0 : index
    %c0_0 = arith.constant 0 : index
    %0 = vector.load %arg2[%c0, %c0_0] : memref<16x32xf32, #tpu.memory_space<vmem>>, vector<16x32xf32>
    %c0_1 = arith.constant 0 : index
    %c0_2 = arith.constant 0 : index
    %1 = vector.load %arg3[%c0_1, %c0_2] : memref<1x32xf32, #tpu.memory_space<vmem>>, vector<1x32xf32>
    %2 = vector.broadcast %1 : vector<1x32xf32> to vector<16x32xf32>
    %3 = arith.subf %0, %2 : vector<16x32xf32>
    %4 = arith.mulf %3, %3 : vector<16x32xf32>
    %cst = arith.constant 1.000000e+00 : f32
    %5 = vector.broadcast %cst : f32 to vector<32x1xf32>
    %cst_3 = arith.constant dense<0.000000e+00> : vector<16x1xf32>
    %6 = tpu.matmul %4, %5, %cst_3 {dimension_numbers = #tpu.dot_dimension_numbers<[1], [0], [0], [1], [0, 0, 1, 1], [], []>} : vector<16x32xf32>, vector<32x1xf32>, vector<16x1xf32> -> vector<16x1xf32>
    %7 = vector.shape_cast %6 : vector<16x1xf32> to vector<16xf32>
    %c0_4 = arith.constant 0 : index
    %c0_5 = arith.constant 0 : index
    %8 = memref.load %arg1[%c0_4, %c0_5] : memref<1x1xf32, #tpu.memory_space<smem>>
    %9 = vector.shape_cast %7 : vector<16xf32> to vector<1x16xf32>
    %10 = vector.broadcast %8 : f32 to vector<1x16xf32>
    %11 = arith.mulf %10, %9 : vector<1x16xf32>
    %cst_6 = arith.constant 1.000000e+00 : f32
    %12 = vector.broadcast %cst_6 : f32 to vector<1x16xf32>
    %13 = arith.cmpf olt, %11, %12 : vector<1x16xf32>
    %cst_7 = arith.constant 0.000000e+00 : f32
    %14 = vector.broadcast %cst_7 : f32 to vector<1x16xf32>
    %15 = arith.select %13, %14, %11 : vector<1x16xi1>, vector<1x16xf32>
    %c0_8 = arith.constant 0 : index
    %c0_9 = arith.constant 0 : index
    %c0_10 = arith.constant 0 : index
    %16 = vector.load %arg4[%c0_8, %c0_9, %c0_10] : memref<1x1x16xf32, #tpu.memory_space<vmem>>, vector<1x1x16xf32>
    %17 = vector.shape_cast %16 : vector<1x1x16xf32> to vector<1x16xf32>
    %18 = vector.shape_cast %15 : vector<1x16xf32> to vector<1x1x16xf32>
    tpu.vector_store %arg4[%c0_8, %c0_9, %c0_10], %18 {strides = array<i32>} : memref<1x1x16xf32, #tpu.memory_space<vmem>>, vector<1x1x16xf32>,
    return
  }
  func.func @transform_0(%arg0: i32) -> (i32, i32) {
    %c0_i32 = arith.constant 0 : i32
    %c0_i32_0 = arith.constant 0 : i32
    %c0_i32_1 = arith.constant 0 : i32
    return %c0_i32, %c0_i32_0 : i32, i32
  }
  func.func @transform_1(%arg0: i32) -> (i32, i32) {
    %c0_i32 = arith.constant 0 : i32
    %c0_i32_0 = arith.constant 0 : i32
    return %arg0, %c0_i32 : i32, i32
  }
  func.func @transform_2(%arg0: i32) -> (i32, i32) {
    %c0_i32 = arith.constant 0 : i32
    %c0_i32_0 = arith.constant 0 : i32
    %c0_i32_1 = arith.constant 0 : i32
    return %c0_i32, %c0_i32_0 : i32, i32
  }
  func.func @transform_3(%arg0: i32) -> (i32, i32, i32) {
    %c0_i32 = arith.constant 0 : i32
    %c0_i32_0 = arith.constant 0 : i32
    %c0_i32_1 = arith.constant 0 : i32
    return %arg0, %c0_i32, %c0_i32_0 : i32, i32, i32
  }
}

</mosaic_0001>

<llo_original>
// kernel: tpu_custom_call.1
$region0: #{tpu_custom_call.1}
  #allocation0 [shape = 'u32[]', space=smem, size = 0x4, offset = 0x4, fixed_abs, tag = 'smem constant byte address 0x4 - core index']
  #allocation1 [shape = 'u32[144,128]{1,0:T(1,128)}', space=vmem, size = 0x12000, scoped, tag = 'internal scratch']
  #allocation2 [shape = 'f32[1,1]{1,0:T(1,128)S(6)}', space=smem, size = 0x200, scoped, tag = 'scoped memory for tpu_custom_call.1']
  %s0 = inlined_call_operand.<no memory space> [shape: f32[1,1], index: 0, kind: input, shape index: {}]
  %s1 = inlined_call_operand.hbm [shape: f32[16,32], index: 1, kind: input, shape index: {}]
  %s2 = inlined_call_operand.vmem [shape: f32[1,32], index: 2, kind: input, shape index: {}]
  %s3 = inlined_call_operand.hbm [shape: f32[1,1,16], index: 3, kind: output, shape index: {}]
  %s4 = sld [smem:[#allocation0]]
  $region26: #{tpu_custom_call.1} parent=0
    _
  %s6 = ssub.s32 1, %s4
  %s7 = scalar_select 0, %s6, %s4
  %8 = sst [smem:[#allocation2]] %s0
  $region1: #{tpu_custom_call.1} parent=0
    #allocation3 [shape = 'u8[8192]{0}', space=vmem, size = 0x2000, scoped, tag = 'input window, operand 1, single buffered']
    #allocation4 [shape = 's32[1]{0}', space=sflag, size = 0x4, scoped, tag = 'scoped memory for tpu_custom_call.1']
    #allocation5 [shape = 's32[1]{0}', space=sflag, size = 0x4, scoped, tag = 'scoped memory for tpu_custom_call.1']
    #allocation6 [shape = 'u8[512]{0}', space=vmem, size = 0x400, scoped, tag = 'output window, operand 0, single buffered']
    %9 = vsyncpa [#allocation4], 0
    %10 = vsyncpa [#allocation5], 0
    // Predicated region
    $region2: #{tpu_custom_call.1} parent=1 // pred_check
      _
    $region3: #{tpu_custom_call.1} parent=1 // pred_check_branch
      %12 = sbr.rel (0) target = $region5
    $region4: #{tpu_custom_call.1} parent=1 // pred_region
      _
    $region5: #{tpu_custom_call.1} parent=1 // pred_fallthru
      _
    // Predicated region
    $region6: #{tpu_custom_call.1} parent=1 // pred_check
      _
    $region7: #{tpu_custom_call.1} parent=1 // pred_check_branch
      %14 = sbr.rel (0) target = $region9
    $region8: #{tpu_custom_call.1} parent=1 // pred_region
      %s16 = ssub.s32 256, 256
      %17 = vsyncadd [#allocation4], %s16
      %s18 = sshll.u32 [#allocation3], 4
      %s19 = int_to_ptr.vmem [resolvable:$true] %s18
      %24 = dma.hbm_to_vmem [thread:$0]  %s1, 256, %s19, [#allocation4], 128, 128, 8
    $region9: #{tpu_custom_call.1} parent=1 // pred_fallthru
      _
    // Predicated region
    $region10: #{tpu_custom_call.1} parent=1 // pred_check
      _
    $region11: #{tpu_custom_call.1} parent=1 // pred_check_branch
      %26 = sbr.rel (0) target = $region13
    $region12: #{tpu_custom_call.1} parent=1 // pred_region
      _
    $region13: #{tpu_custom_call.1} parent=1 // pred_fallthru
      _
    // Predicated region
    $region14: #{tpu_custom_call.1} parent=1 // pred_check
      _
    $region15: #{tpu_custom_call.1} parent=1 // pred_check_branch
      %28 = sbr.rel (0) target = $region17
    $region16: #{tpu_custom_call.1} parent=1 // pred_region
      %29 = dma.done [#allocation4], 256
    $region17: #{tpu_custom_call.1} parent=1 // pred_fallthru
      _
    %v30 = vld [vmem:[#allocation3] sm:$0xff]
    %v31 = vld [vmem:[#allocation3 + $0x8] sm:$0xff]
    %v32 = vld [vmem:[%s2] sm:$0x1]
    %v34 = vlaneseq
    %v35 = vshrl.u32 %v34, 7
    %v36 = vsub.s32 0, %v35
    %v37 = vrot.slane %v32, %v36
    %v39 = vsub.f32 %v30, %v37
    %v40 = vsub.f32 %v31, %v37
    %v41 = vmul.f32 %v39, %v39
    %v42 = vmul.f32 %v40, %v40
    %vm43 = vcmask 261120
    %v45 = vsel %vm43, %v41, 0
    %v48 = vsel %vm43, %v42, 0
    %50 = vmatprep.subr.mxu0 0.0
    %51 = vmatpush1.msra.mxu0 0.0
    %52 = vmatprep.subr.mxu0 0.0
    %53 = vmatpush1.msra.mxu0 0.0
    %54 = vmatprep.subr.mxu0 0.0
    %55 = vmatpush1.msra.mxu0 0.0
    %56 = vmatprep.subr.mxu0 0.0
    %57 = vmatpush1.msra.mxu0 0.0
    %58 = vmatprep.subr.mxu0 0.0
    %59 = vmatpush1.msra.mxu0 0.0
    %60 = vmatprep.subr.mxu0 0.0
    %61 = vmatpush1.msra.mxu0 0.0
    %62 = vmatprep.subr.mxu0 0.0
    %63 = vmatpush1.msra.mxu0 0.0
    %64 = vmatprep.subr.mxu0 0.0
    %65 = vmatpush1.msra.mxu0 0.0
    %66 = vmatprep.subr.mxu0 0.0
    %67 = vmatpush1.msra.mxu0 0.0
    %68 = vmatprep.subr.mxu0 0.0
    %69 = vmatpush1.msra.mxu0 0.0
    %70 = vmatprep.subr.mxu0 0.0
    %71 = vmatpush1.msra.mxu0 0.0
    %72 = vmatprep.subr.mxu0 0.0
    %73 = vmatpush1.msra.mxu0 0.0
    %74 = vmatprep.subr.mxu0 0.0
    %75 = vmatpush1.msra.mxu0 1.0
    %76 = vmatprep.subr.mxu0 0.0
    %77 = vmatpush1.msra.mxu0 1.0
    %78 = vmatprep.subr.mxu0 0.0
    %79 = vmatpush1.msra.mxu0 1.0
    %80 = vmatprep.subr.mxu0 0.0
    %81 = vmatpush1.msra.mxu0 1.0
    %82 = vmatprep.subr.mxu0 0.0
    %83 = vmatpush2.msra.mxu0 0.0
    %84 = vmatprep.subr.mxu0 0.0
    %85 = vmatpush2.msra.mxu0 0.0
    %86 = vmatprep.subr.mxu0 0.0
    %87 = vmatpush2.msra.mxu0 0.0
    %88 = vmatprep.subr.mxu0 0.0
    %89 = vmatpush2.msra.mxu0 0.0
    %90 = vmatprep.subr.mxu0 0.0
    %91 = vmatpush2.msra.mxu0 0.0
    %92 = vmatprep.subr.mxu0 0.0
    %93 = vmatpush2.msra.mxu0 0.0
    %94 = vmatprep.subr.mxu0 0.0
    %95 = vmatpush2.msra.mxu0 0.0
    %96 = vmatprep.subr.mxu0 0.0
    %97 = vmatpush2.msra.mxu0 0.0
    %98 = vmatprep.subr.mxu0 0.0
    %99 = vmatpush2.msra.mxu0 0.0
    %100 = vmatprep.subr.mxu0 0.0
    %101 = vmatpush2.msra.mxu0 0.0
    %102 = vmatprep.subr.mxu0 0.0
    %103 = vmatpush2.msra.mxu0 0.0
    %104 = vmatprep.subr.mxu0 0.0
    %105 = vmatpush2.msra.mxu0 0.0
    %106 = vmatprep.subr.mxu0 0.0
    %107 = vmatpush2.msra.mxu0 0.0
    %108 = vmatprep.subr.mxu0 0.0
    %109 = vmatpush2.msra.mxu0 0.0
    %110 = vmatprep.subr.mxu0 0.0
    %111 = vmatpush2.msra.mxu0 0.0
    %112 = vmatprep.subr.mxu0 0.0
    %113 = vmatpush2.msra.mxu0 0.0
    %114 = vmatprep.mubr.f32.mxu0 0.0
    %115 = vmatmul.mubr.f32.gmra.mxu0 %v45
    %v116 = vpop.f32.mrf.mxu0
    %v117 = vadd.f32 0.0, %v116
    %v118 = vpop.f32.mrf.mxu0
    %119 = vmatprep.mubr.f32.mxu0 0.0
    %120 = vmatmul.mubr.f32.gmra.mxu0 %v48
    %v121 = vpop.f32.mrf.mxu0
    %v122 = vadd.f32 0.0, %v121
    %v123 = vpop.f32.mrf.mxu0
    %124 = vdwg.mxu0
    %s125 = sld [smem:[#allocation2]]
    %v126 = vstv %s125
    %v127 = vmul.f32 %v126, %v117
    %v128 = vmul.f32 %v126, %v122
    %vm129 = vcmp.lt.f32.partialorder %v127, 1.0
    %vm130 = vcmp.lt.f32.partialorder %v128, 1.0
    %v131 = vsel %vm129, 0.0, %v127
    %v132 = vsel %vm130, 0.0, %v128
    %135 = vset.pattern.permute.xlu0 0
    %136 = vperm.xlu0 %135, %v131
    %v137 = vpop.permute.xlu0 %136
    %138 = vset.pattern.permute.xlu0 0
    %139 = vperm.xlu0 %138, %v132
    %v140 = vpop.permute.xlu0 %139
    %v141 = vlaneseq
    %v142 = vand.u32 %v141, 127
    %v143 = vlaneseq
    %v144 = vshrl.u32 %v143, 7
    %v145 = vsub.s32 %v142, %v144
    %v146 = vrot.slane %v137, %v145
    %v147 = vadd.s32 %v142, 4294967288
    %v148 = vlaneseq
    %v149 = vshrl.u32 %v148, 7
    %v150 = vsub.s32 %v147, %v149
    %v151 = vrot.slane %v140, %v150
    %vm152 = vcmask 130112
    %v153 = vsel %vm152, %v151, %v146
    %vm155 = vcmask 122880
    %156 = vst.msk [vmem:[#allocation6] sm:$0x1] %vm155, %v153
    // Predicated region
    $region18: #{tpu_custom_call.1} parent=1 // pred_check
      _
    $region19: #{tpu_custom_call.1} parent=1 // pred_check_branch
      %158 = sbr.rel (0) target = $region21
    $region20: #{tpu_custom_call.1} parent=1 // pred_region
      %s160 = ssub.s32 16, 16
      %161 = vsyncadd [#allocation5], %s160
      %s163 = sshll.u32 [#allocation6], 4
      %s164 = int_to_ptr.vmem [resolvable:$true] %s163
      %166 = dma.vmem_to_hbm [thread:$0]  %s164, 16, %s3, [#allocation5]
    $region21: #{tpu_custom_call.1} parent=1 // pred_fallthru
      _
    // Predicated region
    $region22: #{tpu_custom_call.1} parent=1 // pred_check
      _
    $region23: #{tpu_custom_call.1} parent=1 // pred_check_branch
      %168 = sbr.rel (0) target = $region25
    $region24: #{tpu_custom_call.1} parent=1 // pred_region
      %169 = dma.done [#allocation5], 16
    $region25: #{tpu_custom_call.1} parent=1 // pred_fallthru
      _
    %170 = vsyncpa [#allocation4], 1
    %171 = vsyncpa [#allocation5], 1

</llo_original>
